<compile_context>
chip_gen: v7x
topology: tpu7x:2x2x1
jax: 0.10.0
libtpu: 0.0.40
codegen_flags: <defaults>
</compile_context>

<pallas_src>
import jax
import jax.numpy as jnp
from jax.experimental import pallas as pl
from jax.experimental.pallas import tpu as pltpu


def _dj_kernel(o_ref, w_ref, out_ref, acc_ref):
    """Grid = (K-split, batch blocks, K blocks).  The contraction axis is last
    ("arbitrary").  acc_ref accumulates the C psi components (C=2 real path,
    C=4 complex path: [psi0_re, psi1_re, psi0_im, psi1_im])."""
    k = pl.program_id(2)

    @pl.when(k == 0)
    def _init():
        acc_ref[...] = jnp.zeros_like(acc_ref)

    # (bt, tk) . (C, tk)^T -> (bt, C), accumulated in f32 on the MXU.
    acc_ref[...] += jax.lax.dot_general(
        o_ref[...], w_ref[...],
        dimension_numbers=(((1,), (1,)), ((), ())),
        preferred_element_type=jnp.float32)

    @pl.when(k == pl.num_programs(2) - 1)
    def _finalize():
        out_ref[...] = acc_ref[...]


def _net_dj_pallas(o, w):
    """o: (B, Kflat) oracle stream (flattened, possibly re/im-interleaved).
    w: (C, Kflat) folded weight.  Returns partial psi components (S, B, C)."""
    B, Kflat = o.shape
    C = w.shape[0]
    itemsize = jnp.dtype(o.dtype).itemsize

    # --- per-generation VMEM / tile budget -------------------------------
    try:
        kind = jax.devices()[0].device_kind.lower()
    except Exception:
        kind = ""
    is_v7 = ("v7" in kind) or ("7x" in kind)
    vmem_limit = (48 << 20) if is_v7 else (80 << 20)
    try:
        phys = int(pltpu.get_tpu_info().vmem_capacity_bytes)
        vmem_limit = min(vmem_limit, (phys * 3) // 4)
    except Exception:
        pass
    # budget for the double-buffered oracle stream (the thing that moves bytes)
    stream_budget = (vmem_limit * 3) // 5

    bt = B if B <= 512 else 512           # full-batch block or 512-row tiles
    tk = Kflat                            # Kflat is a power of two (D = 2^(n+1))
    while 2 * bt * tk * itemsize > stream_budget and tk > 128:
        tk //= 2

    # v7x: when the whole batch fits one block, the batch axis gives the second
    # TensorCore nothing to do -> split the K reduction across a leading
    # parallel axis instead (each core produces a partial psi).
    S = 1
    if is_v7 and B <= bt:
        if Kflat // tk >= 2:
            S = 2
        elif tk >= 256:
            tk //= 2
            S = 2
    nk = (Kflat // tk) // S
    nb = pl.cdiv(B, bt)

    cost = pl.CostEstimate(
        flops=2 * B * Kflat * C,
        transcendentals=0,
        bytes_accessed=B * Kflat * itemsize
        + nb * C * Kflat * jnp.dtype(w.dtype).itemsize
        + S * B * C * 4,
    )

    return pl.pallas_call(
        _dj_kernel,
        out_shape=jax.ShapeDtypeStruct((S, B, C), jnp.float32),
        grid_spec=pltpu.PrefetchScalarGridSpec(
            num_scalar_prefetch=0,
            grid=(S, nb, nk),
            in_specs=[
                # oracle stream, flattened: (bt, tk) tiles
                pl.BlockSpec((bt, tk), lambda s, b, k: (b, s * nk + k)),
                # folded weight, transposed (C, tk): sublane-padded, tiny
                pl.BlockSpec((C, tk), lambda s, b, k: (0, s * nk + k)),
            ],
            out_specs=pl.BlockSpec(
                (pl.Squeezed(), bt, C), lambda s, b, k: (s, b, 0)),
            scratch_shapes=[pltpu.VMEM((bt, C), jnp.float32)],
        ),
        compiler_params=pltpu.CompilerParams(
            dimension_semantics=("parallel", "parallel", "arbitrary"),
            vmem_limit_bytes=vmem_limit,
        ),
        cost_estimate=cost,
    )(o, w)


class NetDJ:
    """JAX/Pallas re-implementation of the PyTorch NetDJ forward pass."""

    def __init__(self, n, use_bf16_stream=False):
        self.n = n
        self.D = 2 ** (n + 1)
        # Optional bf16 oracle stream (exact for true DJ oracles with 0/+-1
        # entries); off by default so arbitrary complex oracles keep f32.
        self.stream_dtype = jnp.bfloat16 if use_bf16_stream else jnp.float32

        h = jnp.array([[1.0, 1.0], [1.0, -1.0]], jnp.float32) / jnp.sqrt(2.0)
        x = jnp.array([[0.0, 1.0], [1.0, 0.0]], jnp.float32)
        i2 = jnp.eye(2, dtype=jnp.float32)

        def kron_list(mats):
            out = mats[0]
            for m in mats[1:]:
                out = jnp.kron(out, m)
            return out

        # cir1: X on ancilla qubit n, then H on all n+1 qubits -> v1 = cir1|0>.
        u1 = kron_list([h] * (n + 1)) @ kron_list([i2] * n + [x])
        e0 = jnp.zeros((self.D,), jnp.float32).at[0].set(1.0)
        self.v1 = u1 @ e0                              # (D,), real
        # cir2: H on qubits 0..n-1.
        self.u2 = kron_list([h] * n + [i2])            # (D, D), real

        # Fold v1 and the top-2 rows of U2 into one lane-dense weight:
        #   psi_top[b, i] = sum_{j,k} O[b, j, k] * U2[i, j] * v1[k]
        # Real path:   Wt  (2, K)   with K = D*D,     Wt[i, j*D+k] = U2[i,j]*v1[k]
        K = self.D * self.D
        self.Wt = jnp.einsum('ij,k->ijk', self.u2[0:2, :], self.v1).reshape(2, K)

        # Complex path: fold the re/im interleave into W2t (4, 2K) so that a
        # single matmul over the interleaved stream yields
        # [psi0_re, psi1_re, psi0_im, psi1_im].
        zeros = jnp.zeros_like(self.Wt)

        def interleave(a, b):   # (2,K),(2,K) -> (2,2K): even<-a, odd<-b
            return jnp.stack([a, b], axis=-1).reshape(2, -1)

        self.W2t = jnp.concatenate(
            [interleave(self.Wt, zeros), interleave(zeros, self.Wt)], axis=0)

    def __call__(self, oracles):
        # oracles: (B, D, D) complex (or real) batch of DJ oracle matrices.
        B = oracles.shape[0]
        if jnp.iscomplexobj(oracles):
            # One interleaved (B, 2K) stream; the re/im split is folded into W2t.
            # TODO(synk): lax.bitcast_convert_type rejects complex inputs, so the
            # interleaved view costs one extra XLA copy of the oracle bytes; a
            # true zero-copy bitcast would remove it.
            try:
                o = jax.lax.bitcast_convert_type(oracles, jnp.float32)  # (B,D,D,2)
            except TypeError:
                o = jnp.stack([jnp.real(oracles), jnp.imag(oracles)], axis=-1)
            o = o.astype(self.stream_dtype).reshape(B, -1)
            w = self.W2t.astype(self.stream_dtype)
        else:
            # Real-oracle fast path: stream only the real plane.
            o = oracles.astype(self.stream_dtype).reshape(B, -1)
            w = self.Wt.astype(self.stream_dtype)

        partial = _net_dj_pallas(o, w)          # (S, B, C) partial psi components
        psi = jnp.sum(partial, axis=0)          # (B, C)
        x = jnp.sum(psi * psi, axis=-1)         # (B,)  = |psi0|^2 + |psi1|^2
        # TODO(synk): the PyTorch forward also returns the composed QubitCircuit
        # object `cir`, which has no tensor equivalent; only logits are returned.
        return jnp.stack([x, 1.0 - x], axis=-1)


if __name__ == "__main__":
    n = 4                      # 4 "data" qubits + 1 ancilla
    D = 2 ** (n + 1)           # 32
    B = 4

    key = jax.random.PRNGKey(0)
    k1, k2 = jax.random.split(key)
    oracles_c = (jax.random.normal(k1, (B, D, D), jnp.float32)
                 + 1j * jax.random.normal(k2, (B, D, D), jnp.float32)
                 ).astype(jnp.complex64)
    oracles_r = jax.random.normal(k2, (B, D, D), jnp.float32)

    net = NetDJ(n)
    logits_c = jax.block_until_ready(net(oracles_c))   # complex path
    logits_r = jax.block_until_ready(net(oracles_r))   # real fast path

    # Pure-JAX reference of the exact PyTorch forward semantics.
    v1c = net.v1.astype(jnp.complex64)
    u2c = net.u2.astype(jnp.complex64)

    def ref_logits(o):
        psi = jnp.einsum('ij,bjk,k->bi', u2c, o.astype(jnp.complex64), v1c)
        xr = jnp.abs(psi[:, 0]) ** 2 + jnp.abs(psi[:, 1]) ** 2
        return jnp.stack([xr, 1.0 - xr], axis=-1)

    ref_c = ref_logits(oracles_c)
    ref_r = ref_logits(oracles_r)

    assert logits_c.shape == (B, 2) and logits_r.shape == (B, 2)
    assert jnp.allclose(logits_c, ref_c, atol=1e-3, rtol=1e-3), (logits_c, ref_c)
    assert jnp.allclose(logits_r, ref_r, atol=1e-3, rtol=1e-3), (logits_r, ref_r)
    print("KERNEL_OK")
</pallas_src>

<mosaic_0001>
module attributes {stable_mosaic.version = 11 : i64} {
  func.func @_dj_kernel(%arg0: i32, %arg1: i32, %arg2: i32, %arg3: memref<4x2048xf32, #tpu.memory_space<vmem>>, %arg4: memref<4x2048xf32, #tpu.memory_space<vmem>>, %arg5: memref<1x4x4xf32, #tpu.memory_space<vmem>>, %arg6: memref<4x4xf32, #tpu.memory_space<vmem>>) attributes {dimension_semantics = [#tpu.dimension_semantics<parallel>, #tpu.dimension_semantics<parallel>, #tpu.dimension_semantics<arbitrary>], iteration_bounds = array<i64: 1, 1, 1>, scalar_prefetch = 0 : i64, scratch_operands = 1 : i64, tpu.core_type = #tpu.core_type<tc>, window_params = [{transform_indices = @transform_0, window_bounds = array<i64: 4, 2048>}, {transform_indices = @transform_1, window_bounds = array<i64: 4, 2048>}, {transform_indices = @transform_2, window_bounds = array<i64: 1, 4, 4>}]} {
    %c0_i32 = arith.constant 0 : i32
    %0 = arith.cmpi eq, %arg2, %c0_i32 : i32
    %1 = arith.extui %0 : i1 to i32
    %c0_i32_0 = arith.constant 0 : i32
    %2 = arith.cmpi ne, %1, %c0_i32_0 : i32
    scf.if %2 {
      %cst_10 = arith.constant 0.000000e+00 : f32
      %12 = vector.broadcast %cst_10 : f32 to vector<4x4xf32>
      %c0_11 = arith.constant 0 : index
      %c0_12 = arith.constant 0 : index
      %13 = vector.load %arg6[%c0_11, %c0_12] : memref<4x4xf32, #tpu.memory_space<vmem>>, vector<4x4xf32>
      tpu.vector_store %arg6[%c0_11, %c0_12], %12 {strides = array<i32>} : memref<4x4xf32, #tpu.memory_space<vmem>>, vector<4x4xf32>,
    } else {
    }
    %c0 = arith.constant 0 : index
    %c0_1 = arith.constant 0 : index
    %3 = vector.load %arg6[%c0, %c0_1] : memref<4x4xf32, #tpu.memory_space<vmem>>, vector<4x4xf32>
    %c0_2 = arith.constant 0 : index
    %c0_3 = arith.constant 0 : index
    %4 = vector.load %arg3[%c0_2, %c0_3] : memref<4x2048xf32, #tpu.memory_space<vmem>>, vector<4x2048xf32>
    %c0_4 = arith.constant 0 : index
    %c0_5 = arith.constant 0 : index
    %5 = vector.load %arg4[%c0_4, %c0_5] : memref<4x2048xf32, #tpu.memory_space<vmem>>, vector<4x2048xf32>
    %cst = arith.constant dense<0.000000e+00> : vector<4x4xf32>
    %6 = tpu.matmul %4, %5, %cst {dimension_numbers = #tpu.dot_dimension_numbers<[1], [1], [0], [0], [0, 0, 1, 0], [], []>} : vector<4x2048xf32>, vector<4x2048xf32>, vector<4x4xf32> -> vector<4x4xf32>
    %7 = arith.addf %3, %6 : vector<4x4xf32>
    %c0_6 = arith.constant 0 : index
    %c0_7 = arith.constant 0 : index
    %8 = vector.load %arg6[%c0_6, %c0_7] : memref<4x4xf32, #tpu.memory_space<vmem>>, vector<4x4xf32>
    tpu.vector_store %arg6[%c0_6, %c0_7], %7 {strides = array<i32>} : memref<4x4xf32, #tpu.memory_space<vmem>>, vector<4x4xf32>,
    %c0_i32_8 = arith.constant 0 : i32
    %9 = arith.cmpi eq, %arg2, %c0_i32_8 : i32
    %10 = arith.extui %9 : i1 to i32
    %c0_i32_9 = arith.constant 0 : i32
    %11 = arith.cmpi ne, %10, %c0_i32_9 : i32
    scf.if %11 {
      %c0_10 = arith.constant 0 : index
      %c0_11 = arith.constant 0 : index
      %12 = vector.load %arg6[%c0_10, %c0_11] : memref<4x4xf32, #tpu.memory_space<vmem>>, vector<4x4xf32>
      %c0_12 = arith.constant 0 : index
      %c0_13 = arith.constant 0 : index
      %c0_14 = arith.constant 0 : index
      %13 = vector.load %arg5[%c0_12, %c0_13, %c0_14] : memref<1x4x4xf32, #tpu.memory_space<vmem>>, vector<1x4x4xf32>
      %14 = vector.shape_cast %13 : vector<1x4x4xf32> to vector<4x4xf32>
      %15 = vector.shape_cast %12 : vector<4x4xf32> to vector<1x4x4xf32>
      tpu.vector_store %arg5[%c0_12, %c0_13, %c0_14], %15 {strides = array<i32>} : memref<1x4x4xf32, #tpu.memory_space<vmem>>, vector<1x4x4xf32>,
    } else {
    }
    return
  }
  func.func @transform_0(%arg0: i32, %arg1: i32, %arg2: i32) -> (i32, i32) {
    %c1_i32 = arith.constant 1 : i32
    %0 = arith.muli %arg0, %c1_i32 : i32
    %1 = arith.addi %0, %arg2 : i32
    %c0_i32 = arith.constant 0 : i32
    return %arg1, %1 : i32, i32
  }
  func.func @transform_1(%arg0: i32, %arg1: i32, %arg2: i32) -> (i32, i32) {
    %c1_i32 = arith.constant 1 : i32
    %0 = arith.muli %arg0, %c1_i32 : i32
    %1 = arith.addi %0, %arg2 : i32
    %c0_i32 = arith.constant 0 : i32
    %c0_i32_0 = arith.constant 0 : i32
    return %c0_i32, %1 : i32, i32
  }
  func.func @transform_2(%arg0: i32, %arg1: i32, %arg2: i32) -> (i32, i32, i32) {
    %c0_i32 = arith.constant 0 : i32
    %c0_i32_0 = arith.constant 0 : i32
    return %arg0, %arg1, %c0_i32 : i32, i32, i32
  }
}

</mosaic_0001>

<llo_original>
// kernel: tpu_custom_call.1
$region0: #{tpu_custom_call.1}
  #allocation0 [shape = 'u32[]', space=smem, size = 0x4, offset = 0x4, fixed_abs, tag = 'smem constant byte address 0x4 - core index']
  #allocation1 [shape = 'u32[144,128]{1,0:T(1,128)}', space=vmem, size = 0x12000, scoped, tag = 'internal scratch']
  #allocation2 [shape = 'f32[4,4]{1,0:T(4,128)}', space=vmem, size = 0x800, scoped, tag = 'scratch operand']
  %s0 = inlined_call_operand.hbm [shape: f32[4,2048], index: 0, kind: input, shape index: {}]
  %s1 = inlined_call_operand.hbm [shape: f32[4,2048], index: 1, kind: input, shape index: {}]
  %s2 = inlined_call_operand.hbm [shape: f32[1,4,4], index: 2, kind: output, shape index: {}]
  %s3 = sld [smem:[#allocation0]]
  $region34: #{tpu_custom_call.1} parent=0
    _
  %s5 = ssub.s32 1, %s3
  %s6 = scalar_select 0, %s5, %s3
  $region1: #{tpu_custom_call.1} parent=0
    #allocation3 [shape = 'u8[32768]{0}', space=vmem, size = 0x8000, scoped, tag = 'input window, operand 0, single buffered']
    #allocation4 [shape = 's32[1]{0}', space=sflag, size = 0x4, scoped, tag = 'scoped memory for tpu_custom_call.1']
    #allocation5 [shape = 's32[1]{0}', space=sflag, size = 0x4, scoped, tag = 'scoped memory for tpu_custom_call.1']
    #allocation6 [shape = 'u8[32768]{0}', space=vmem, size = 0x8000, scoped, tag = 'input window, operand 1, single buffered']
    #allocation7 [shape = 's32[1]{0}', space=sflag, size = 0x4, scoped, tag = 'scoped memory for tpu_custom_call.1']
    #allocation8 [shape = 'u8[2048]{0}', space=vmem, size = 0x800, scoped, tag = 'output window, operand 0, single buffered']
    %7 = vsyncpa [#allocation4], 0
    %8 = vsyncpa [#allocation7], 0
    %9 = vsyncpa [#allocation5], 0
    // Predicated region
    $region2: #{tpu_custom_call.1} parent=1 // pred_check
      _
    $region3: #{tpu_custom_call.1} parent=1 // pred_check_branch
      %11 = sbr.rel (0) target = $region5
    $region4: #{tpu_custom_call.1} parent=1 // pred_region
      %s12 = sadd.s32 0, 0
      %s13 = smul.u32 16, %s12
      %s15 = ssub.s32 1024, 1024
      %16 = vsyncadd [#allocation4], %s15
      %s17 = smul.addr %s13, 64
      %s18 = scalar_lea.hbm %s0, %s17
      %s20 = sshll.u32 [#allocation3], 4
      %s21 = int_to_ptr.vmem [resolvable:$true] %s20
      %23 = dma.hbm_to_vmem [thread:$0]  %s18, 1024, %s21, [#allocation4]
    $region5: #{tpu_custom_call.1} parent=1 // pred_fallthru
      _
    // Predicated region
    $region6: #{tpu_custom_call.1} parent=1 // pred_check
      _
    $region7: #{tpu_custom_call.1} parent=1 // pred_check_branch
      %25 = sbr.rel (0) target = $region9
    $region8: #{tpu_custom_call.1} parent=1 // pred_region
      %s26 = sadd.s32 0, 0
      %s27 = smul.u32 16, %s26
      %s29 = ssub.s32 1024, 1024
      %30 = vsyncadd [#allocation7], %s29
      %s31 = smul.addr %s27, 64
      %s32 = scalar_lea.hbm %s1, %s31
      %s34 = sshll.u32 [#allocation6], 4
      %s35 = int_to_ptr.vmem [resolvable:$true] %s34
      %37 = dma.hbm_to_vmem [thread:$0]  %s32, 1024, %s35, [#allocation7]
    $region9: #{tpu_custom_call.1} parent=1 // pred_fallthru
      _
    // Predicated region
    $region10: #{tpu_custom_call.1} parent=1 // pred_check
      _
    $region11: #{tpu_custom_call.1} parent=1 // pred_check_branch
      %39 = sbr.rel (0) target = $region13
    $region12: #{tpu_custom_call.1} parent=1 // pred_region
      %40 = dma.done [#allocation4], 1024
    $region13: #{tpu_custom_call.1} parent=1 // pred_fallthru
      _
    // Predicated region
    $region14: #{tpu_custom_call.1} parent=1 // pred_check
      _
    $region15: #{tpu_custom_call.1} parent=1 // pred_check_branch
      %42 = sbr.rel (0) target = $region17
    $region16: #{tpu_custom_call.1} parent=1 // pred_region
      %43 = dma.done [#allocation7], 1024
    $region17: #{tpu_custom_call.1} parent=1 // pred_fallthru
      _
    %s44 = sadd.s32 0, 0
    %s45 = smul.u32 16, %s44
    %s46 = sadd.s32 0, 0
    %s47 = smul.u32 16, %s46
    %p48 = scmp.eq.s32.totalorder 0, 0
    // Predicated region
    $region18: #{tpu_custom_call.1} parent=1 // pred_check
      %p49 = pneg %p48
    $region19: #{tpu_custom_call.1} parent=1 // pred_check_branch
      %51 = sbr.rel (%p49) target = $region21
    $region20: #{tpu_custom_call.1} parent=1 // pred_region
      %vm52 = vcmask 27648
      %53 = vst.msk [vmem:[#allocation2] sm:$0xf] %vm52, 0.0
    $region21: #{tpu_custom_call.1} parent=1 // pred_fallthru
      _
    %v54 = vld [vmem:[#allocation2] sm:$0xf]
    %v55 = vld [vmem:[#allocation3] sm:$0xff]
    %v56 = vld [vmem:[#allocation3 + $0x8] sm:$0xff]
    %v57 = vld [vmem:[#allocation3 + $0x10] sm:$0xff]
    %v58 = vld [vmem:[#allocation3 + $0x18] sm:$0xff]
    %v59 = vld [vmem:[#allocation3 + $0x20] sm:$0xff]
    %v60 = vld [vmem:[#allocation3 + $0x28] sm:$0xff]
    %v61 = vld [vmem:[#allocation3 + $0x30] sm:$0xff]
    %v62 = vld [vmem:[#allocation3 + $0x38] sm:$0xff]
    %v63 = vld [vmem:[#allocation6] sm:$0xff]
    %v64 = vld [vmem:[#allocation6 + $0x8] sm:$0xff]
    %v65 = vld [vmem:[#allocation6 + $0x10] sm:$0xff]
    %v66 = vld [vmem:[#allocation6 + $0x18] sm:$0xff]
    %v67 = vld [vmem:[#allocation6 + $0x20] sm:$0xff]
    %v68 = vld [vmem:[#allocation6 + $0x28] sm:$0xff]
    %v69 = vld [vmem:[#allocation6 + $0x30] sm:$0xff]
    %v70 = vld [vmem:[#allocation6 + $0x38] sm:$0xff]
    %v79 = vcombine.high %v55, %v55
    %v80 = vcombine.high %v56, %v56
    %v81 = vcombine.high %v57, %v57
    %v82 = vcombine.high %v58, %v58
    %v83 = vcombine.high %v59, %v59
    %v84 = vcombine.high %v60, %v60
    %v85 = vcombine.high %v61, %v61
    %v86 = vcombine.high %v62, %v62
    %v103 = vcombine.high %v63, %v63
    %v104 = vcombine.high %v64, %v64
    %v105 = vcombine.high %v65, %v65
    %v106 = vcombine.high %v66, %v66
    %v107 = vcombine.high %v67, %v67
    %v108 = vcombine.high %v68, %v68
    %v109 = vcombine.high %v69, %v69
    %v110 = vcombine.high %v70, %v70
    %119 = vmatprep.subr.mxu0 %v103
    %120 = vmatpush1.xpose.msra.mxu0 %v63
    %121 = vmatprep.subr.mxu0 0.0
    %122 = vmatpush1.xpose.msra.mxu0 0.0
    %123 = vmatprep.subr.mxu0 0.0
    %124 = vmatpush1.xpose.msra.mxu0 0.0
    %125 = vmatprep.subr.mxu0 0.0
    %126 = vmatpush1.xpose.msra.mxu0 0.0
    %127 = vmatprep.subr.mxu0 0.0
    %128 = vmatpush1.xpose.msra.mxu0 0.0
    %129 = vmatprep.subr.mxu0 0.0
    %130 = vmatpush1.xpose.msra.mxu0 0.0
    %131 = vmatprep.subr.mxu0 0.0
    %132 = vmatpush1.xpose.msra.mxu0 0.0
    %133 = vmatprep.subr.mxu0 0.0
    %134 = vmatpush1.xpose.msra.mxu0 0.0
    %135 = vmatprep.subr.mxu0 0.0
    %136 = vmatpush1.xpose.msra.mxu0 0.0
    %137 = vmatprep.subr.mxu0 0.0
    %138 = vmatpush1.xpose.msra.mxu0 0.0
    %139 = vmatprep.subr.mxu0 0.0
    %140 = vmatpush1.xpose.msra.mxu0 0.0
    %141 = vmatprep.subr.mxu0 0.0
    %142 = vmatpush1.xpose.msra.mxu0 0.0
    %143 = vmatprep.subr.mxu0 0.0
    %144 = vmatpush1.xpose.msra.mxu0 0.0
    %145 = vmatprep.subr.mxu0 0.0
    %146 = vmatpush1.xpose.msra.mxu0 0.0
    %147 = vmatprep.subr.mxu0 0.0
    %148 = vmatpush1.xpose.msra.mxu0 0.0
    %149 = vmatprep.subr.mxu0 0.0
    %150 = vmatpush1.xpose.msra.mxu0 0.0
    %151 = vmatprep.subr.mxu0 0.0
    %152 = vmatpush1.xpose.msra.mxu0 0.0
    %153 = vmatprep.subr.mxu0 0.0
    %154 = vmatpush1.xpose.msra.mxu0 0.0
    %155 = vmatprep.subr.mxu0 0.0
    %156 = vmatpush1.xpose.msra.mxu0 0.0
    %157 = vmatprep.subr.mxu0 0.0
    %158 = vmatpush1.xpose.msra.mxu0 0.0
    %159 = vmatprep.subr.mxu0 0.0
    %160 = vmatpush1.xpose.msra.mxu0 0.0
    %161 = vmatprep.subr.mxu0 0.0
    %162 = vmatpush1.xpose.msra.mxu0 0.0
    %163 = vmatprep.subr.mxu0 0.0
    %164 = vmatpush1.xpose.msra.mxu0 0.0
    %165 = vmatprep.subr.mxu0 0.0
    %166 = vmatpush1.xpose.msra.mxu0 0.0
    %167 = vmatprep.subr.mxu0 0.0
    %168 = vmatpush1.xpose.msra.mxu0 0.0
    %169 = vmatprep.subr.mxu0 0.0
    %170 = vmatpush1.xpose.msra.mxu0 0.0
    %171 = vmatprep.subr.mxu0 0.0
    %172 = vmatpush1.xpose.msra.mxu0 0.0
    %173 = vmatprep.subr.mxu0 0.0
    %174 = vmatpush1.xpose.msra.mxu0 0.0
    %175 = vmatprep.subr.mxu0 0.0
    %176 = vmatpush1.xpose.msra.mxu0 0.0
    %177 = vmatprep.subr.mxu0 0.0
    %178 = vmatpush1.xpose.msra.mxu0 0.0
    %179 = vmatprep.subr.mxu0 0.0
    %180 = vmatpush1.xpose.msra.mxu0 0.0
    %181 = vmatprep.subr.mxu0 0.0
    %182 = vmatpush1.xpose.msra.mxu0 0.0
    %183 = vmatprep.mubr.f32.mxu0 %v79
    %184 = vmatmul.mubr.f32.gmra.mrb[0].mxu0 %v55
    %v185 = vpop.f32.mrb[0].mxu0
    %v186 = vadd.f32 0.0, %v185
    %v187 = vpop.f32.mrb[0].mxu0
    %188 = vdwg.mxu0
    %189 = vmatprep.subr.mxu0 %v104
    %190 = vmatpush1.xpose.msra.mxu0 %v64
    %191 = vmatprep.subr.mxu0 0.0
    %192 = vmatpush1.xpose.msra.mxu0 0.0
    %193 = vmatprep.subr.mxu0 0.0
    %194 = vmatpush1.xpose.msra.mxu0 0.0
    %195 = vmatprep.subr.mxu0 0.0
    %196 = vmatpush1.xpose.msra.mxu0 0.0
    %197 = vmatprep.subr.mxu0 0.0
    %198 = vmatpush1.xpose.msra.mxu0 0.0
    %199 = vmatprep.subr.mxu0 0.0
    %200 = vmatpush1.xpose.msra.mxu0 0.0
    %201 = vmatprep.subr.mxu0 0.0
    %202 = vmatpush1.xpose.msra.mxu0 0.0
    %203 = vmatprep.subr.mxu0 0.0
    %204 = vmatpush1.xpose.msra.mxu0 0.0
    %205 = vmatprep.subr.mxu0 0.0
    %206 = vmatpush1.xpose.msra.mxu0 0.0
    %207 = vmatprep.subr.mxu0 0.0
    %208 = vmatpush1.xpose.msra.mxu0 0.0
    %209 = vmatprep.subr.mxu0 0.0
    %210 = vmatpush1.xpose.msra.mxu0 0.0
    %211 = vmatprep.subr.mxu0 0.0
    %212 = vmatpush1.xpose.msra.mxu0 0.0
    %213 = vmatprep.subr.mxu0 0.0
    %214 = vmatpush1.xpose.msra.mxu0 0.0
    %215 = vmatprep.subr.mxu0 0.0
    %216 = vmatpush1.xpose.msra.mxu0 0.0
    %217 = vmatprep.subr.mxu0 0.0
    %218 = vmatpush1.xpose.msra.mxu0 0.0
    %219 = vmatprep.subr.mxu0 0.0
    %220 = vmatpush1.xpose.msra.mxu0 0.0
    %221 = vmatprep.subr.mxu0 0.0
    %222 = vmatpush1.xpose.msra.mxu0 0.0
    %223 = vmatprep.subr.mxu0 0.0
    %224 = vmatpush1.xpose.msra.mxu0 0.0
    %225 = vmatprep.subr.mxu0 0.0
    %226 = vmatpush1.xpose.msra.mxu0 0.0
    %227 = vmatprep.subr.mxu0 0.0
    %228 = vmatpush1.xpose.msra.mxu0 0.0
    %229 = vmatprep.subr.mxu0 0.0
    %230 = vmatpush1.xpose.msra.mxu0 0.0
    %231 = vmatprep.subr.mxu0 0.0
    %232 = vmatpush1.xpose.msra.mxu0 0.0
    %233 = vmatprep.subr.mxu0 0.0
    %234 = vmatpush1.xpose.msra.mxu0 0.0
    %235 = vmatprep.subr.mxu0 0.0
    %236 = vmatpush1.xpose.msra.mxu0 0.0
    %237 = vmatprep.subr.mxu0 0.0
    %238 = vmatpush1.xpose.msra.mxu0 0.0
    %239 = vmatprep.subr.mxu0 0.0
    %240 = vmatpush1.xpose.msra.mxu0 0.0
    %241 = vmatprep.subr.mxu0 0.0
    %242 = vmatpush1.xpose.msra.mxu0 0.0
    %243 = vmatprep.subr.mxu0 0.0
    %244 = vmatpush1.xpose.msra.mxu0 0.0
    %245 = vmatprep.subr.mxu0 0.0
    %246 = vmatpush1.xpose.msra.mxu0 0.0
    %247 = vmatprep.subr.mxu0 0.0
    %248 = vmatpush1.xpose.msra.mxu0 0.0
    %249 = vmatprep.subr.mxu0 0.0
    %250 = vmatpush1.xpose.msra.mxu0 0.0
    %251 = vmatprep.subr.mxu0 0.0
    %252 = vmatpush1.xpose.msra.mxu0 0.0
    %253 = vmatprep.mubr.f32.mxu0 %v80
    %254 = vmatmul.mubr.f32.gmra.mrb[0].mxu0 %v56
    %v255 = vpop.f32.mrb[0].mxu0
    %v256 = vadd.f32 %v186, %v255
    %v257 = vpop.f32.mrb[0].mxu0
    %258 = vdwg.mxu0
    %259 = vmatprep.subr.mxu0 %v105
    %260 = vmatpush1.xpose.msra.mxu0 %v65
    %261 = vmatprep.subr.mxu0 0.0
    %262 = vmatpush1.xpose.msra.mxu0 0.0
    %263 = vmatprep.subr.mxu0 0.0
    %264 = vmatpush1.xpose.msra.mxu0 0.0
    %265 = vmatprep.subr.mxu0 0.0
    %266 = vmatpush1.xpose.msra.mxu0 0.0
    %267 = vmatprep.subr.mxu0 0.0
    %268 = vmatpush1.xpose.msra.mxu0 0.0
    %269 = vmatprep.subr.mxu0 0.0
    %270 = vmatpush1.xpose.msra.mxu0 0.0
    %271 = vmatprep.subr.mxu0 0.0
    %272 = vmatpush1.xpose.msra.mxu0 0.0
    %273 = vmatprep.subr.mxu0 0.0
    %274 = vmatpush1.xpose.msra.mxu0 0.0
    %275 = vmatprep.subr.mxu0 0.0
    %276 = vmatpush1.xpose.msra.mxu0 0.0
    %277 = vmatprep.subr.mxu0 0.0
    %278 = vmatpush1.xpose.msra.mxu0 0.0
    %279 = vmatprep.subr.mxu0 0.0
    %280 = vmatpush1.xpose.msra.mxu0 0.0
    %281 = vmatprep.subr.mxu0 0.0
    %282 = vmatpush1.xpose.msra.mxu0 0.0
    %283 = vmatprep.subr.mxu0 0.0
    %284 = vmatpush1.xpose.msra.mxu0 0.0
    %285 = vmatprep.subr.mxu0 0.0
    %286 = vmatpush1.xpose.msra.mxu0 0.0
    %287 = vmatprep.subr.mxu0 0.0
    %288 = vmatpush1.xpose.msra.mxu0 0.0
    %289 = vmatprep.subr.mxu0 0.0
    %290 = vmatpush1.xpose.msra.mxu0 0.0
    %291 = vmatprep.subr.mxu0 0.0
    %292 = vmatpush1.xpose.msra.mxu0 0.0
    %293 = vmatprep.subr.mxu0 0.0
    %294 = vmatpush1.xpose.msra.mxu0 0.0
    %295 = vmatprep.subr.mxu0 0.0
    %296 = vmatpush1.xpose.msra.mxu0 0.0
    %297 = vmatprep.subr.mxu0 0.0
    %298 = vmatpush1.xpose.msra.mxu0 0.0
    %299 = vmatprep.subr.mxu0 0.0
    %300 = vmatpush1.xpose.msra.mxu0 0.0
    %301 = vmatprep.subr.mxu0 0.0
    %302 = vmatpush1.xpose.msra.mxu0 0.0
    %303 = vmatprep.subr.mxu0 0.0
    %304 = vmatpush1.xpose.msra.mxu0 0.0
    %305 = vmatprep.subr.mxu0 0.0
    %306 = vmatpush1.xpose.msra.mxu0 0.0
    %307 = vmatprep.subr.mxu0 0.0
    %308 = vmatpush1.xpose.msra.mxu0 0.0
    %309 = vmatprep.subr.mxu0 0.0
    %310 = vmatpush1.xpose.msra.mxu0 0.0
    %311 = vmatprep.subr.mxu0 0.0
    %312 = vmatpush1.xpose.msra.mxu0 0.0
    %313 = vmatprep.subr.mxu0 0.0
    %314 = vmatpush1.xpose.msra.mxu0 0.0
    %315 = vmatprep.subr.mxu0 0.0
    %316 = vmatpush1.xpose.msra.mxu0 0.0
    %317 = vmatprep.subr.mxu0 0.0
    %318 = vmatpush1.xpose.msra.mxu0 0.0
    %319 = vmatprep.subr.mxu0 0.0
    %320 = vmatpush1.xpose.msra.mxu0 0.0
    %321 = vmatprep.subr.mxu0 0.0
    %322 = vmatpush1.xpose.msra.mxu0 0.0
    %323 = vmatprep.mubr.f32.mxu0 %v81
    %324 = vmatmul.mubr.f32.gmra.mrb[0].mxu0 %v57
    %v325 = vpop.f32.mrb[0].mxu0
    %v326 = vadd.f32 %v256, %v325
    %v327 = vpop.f32.mrb[0].mxu0
    %328 = vdwg.mxu0
    %329 = vmatprep.subr.mxu0 %v106
    %330 = vmatpush1.xpose.msra.mxu0 %v66
    %331 = vmatprep.subr.mxu0 0.0
    %332 = vmatpush1.xpose.msra.mxu0 0.0
    %333 = vmatprep.subr.mxu0 0.0
    %334 = vmatpush1.xpose.msra.mxu0 0.0
    %335 = vmatprep.subr.mxu0 0.0
    %336 = vmatpush1.xpose.msra.mxu0 0.0
    %337 = vmatprep.subr.mxu0 0.0
    %338 = vmatpush1.xpose.msra.mxu0 0.0
    %339 = vmatprep.subr.mxu0 0.0
    %340 = vmatpush1.xpose.msra.mxu0 0.0
    %341 = vmatprep.subr.mxu0 0.0
    %342 = vmatpush1.xpose.msra.mxu0 0.0
    %343 = vmatprep.subr.mxu0 0.0
    %344 = vmatpush1.xpose.msra.mxu0 0.0
    %345 = vmatprep.subr.mxu0 0.0
    %346 = vmatpush1.xpose.msra.mxu0 0.0
    %347 = vmatprep.subr.mxu0 0.0
    %348 = vmatpush1.xpose.msra.mxu0 0.0
    %349 = vmatprep.subr.mxu0 0.0
    %350 = vmatpush1.xpose.msra.mxu0 0.0
    %351 = vmatprep.subr.mxu0 0.0
    %352 = vmatpush1.xpose.msra.mxu0 0.0
    %353 = vmatprep.subr.mxu0 0.0
    %354 = vmatpush1.xpose.msra.mxu0 0.0
    %355 = vmatprep.subr.mxu0 0.0
    %356 = vmatpush1.xpose.msra.mxu0 0.0
    %357 = vmatprep.subr.mxu0 0.0
    %358 = vmatpush1.xpose.msra.mxu0 0.0
    %359 = vmatprep.subr.mxu0 0.0
    %360 = vmatpush1.xpose.msra.mxu0 0.0
    %361 = vmatprep.subr.mxu0 0.0
    %362 = vmatpush1.xpose.msra.mxu0 0.0
    %363 = vmatprep.subr.mxu0 0.0
    %364 = vmatpush1.xpose.msra.mxu0 0.0
    %365 = vmatprep.subr.mxu0 0.0
    %366 = vmatpush1.xpose.msra.mxu0 0.0
    %367 = vmatprep.subr.mxu0 0.0
    %368 = vmatpush1.xpose.msra.mxu0 0.0
    %369 = vmatprep.subr.mxu0 0.0
    %370 = vmatpush1.xpose.msra.mxu0 0.0
    %371 = vmatprep.subr.mxu0 0.0
    %372 = vmatpush1.xpose.msra.mxu0 0.0
    %373 = vmatprep.subr.mxu0 0.0
    %374 = vmatpush1.xpose.msra.mxu0 0.0
    %375 = vmatprep.subr.mxu0 0.0
    %376 = vmatpush1.xpose.msra.mxu0 0.0
    %377 = vmatprep.subr.mxu0 0.0
    %378 = vmatpush1.xpose.msra.mxu0 0.0
    %379 = vmatprep.subr.mxu0 0.0
    %380 = vmatpush1.xpose.msra.mxu0 0.0
    %381 = vmatprep.subr.mxu0 0.0
    %382 = vmatpush1.xpose.msra.mxu0 0.0
    %383 = vmatprep.subr.mxu0 0.0
    %384 = vmatpush1.xpose.msra.mxu0 0.0
    %385 = vmatprep.subr.mxu0 0.0
    %386 = vmatpush1.xpose.msra.mxu0 0.0
    %387 = vmatprep.subr.mxu0 0.0
    %388 = vmatpush1.xpose.msra.mxu0 0.0
    %389 = vmatprep.subr.mxu0 0.0
    %390 = vmatpush1.xpose.msra.mxu0 0.0
    %391 = vmatprep.subr.mxu0 0.0
    %392 = vmatpush1.xpose.msra.mxu0 0.0
    %393 = vmatprep.mubr.f32.mxu0 %v82
    %394 = vmatmul.mubr.f32.gmra.mrb[0].mxu0 %v58
    %v395 = vpop.f32.mrb[0].mxu0
    %v396 = vadd.f32 %v326, %v395
    %v397 = vpop.f32.mrb[0].mxu0
    %398 = vdwg.mxu0
    %399 = vmatprep.subr.mxu0 %v107
    %400 = vmatpush1.xpose.msra.mxu0 %v67
    %401 = vmatprep.subr.mxu0 0.0
    %402 = vmatpush1.xpose.msra.mxu0 0.0
    %403 = vmatprep.subr.mxu0 0.0
    %404 = vmatpush1.xpose.msra.mxu0 0.0
    %405 = vmatprep.subr.mxu0 0.0
    %406 = vmatpush1.xpose.msra.mxu0 0.0
    %407 = vmatprep.subr.mxu0 0.0
    %408 = vmatpush1.xpose.msra.mxu0 0.0
    %409 = vmatprep.subr.mxu0 0.0
    %410 = vmatpush1.xpose.msra.mxu0 0.0
    %411 = vmatprep.subr.mxu0 0.0
    %412 = vmatpush1.xpose.msra.mxu0 0.0
    %413 = vmatprep.subr.mxu0 0.0
    %414 = vmatpush1.xpose.msra.mxu0 0.0
    %415 = vmatprep.subr.mxu0 0.0
    %416 = vmatpush1.xpose.msra.mxu0 0.0
    %417 = vmatprep.subr.mxu0 0.0
    %418 = vmatpush1.xpose.msra.mxu0 0.0
    %419 = vmatprep.subr.mxu0 0.0
    %420 = vmatpush1.xpose.msra.mxu0 0.0
    %421 = vmatprep.subr.mxu0 0.0
    %422 = vmatpush1.xpose.msra.mxu0 0.0
    %423 = vmatprep.subr.mxu0 0.0
    %424 = vmatpush1.xpose.msra.mxu0 0.0
    %425 = vmatprep.subr.mxu0 0.0
    %426 = vmatpush1.xpose.msra.mxu0 0.0
    %427 = vmatprep.subr.mxu0 0.0
    %428 = vmatpush1.xpose.msra.mxu0 0.0
    %429 = vmatprep.subr.mxu0 0.0
    %430 = vmatpush1.xpose.msra.mxu0 0.0
    %431 = vmatprep.subr.mxu0 0.0
    %432 = vmatpush1.xpose.msra.mxu0 0.0
    %433 = vmatprep.subr.mxu0 0.0
    %434 = vmatpush1.xpose.msra.mxu0 0.0
    %435 = vmatprep.subr.mxu0 0.0
    %436 = vmatpush1.xpose.msra.mxu0 0.0
    %437 = vmatprep.subr.mxu0 0.0
    %438 = vmatpush1.xpose.msra.mxu0 0.0
    %439 = vmatprep.subr.mxu0 0.0
    %440 = vmatpush1.xpose.msra.mxu0 0.0
    %441 = vmatprep.subr.mxu0 0.0
    %442 = vmatpush1.xpose.msra.mxu0 0.0
    %443 = vmatprep.subr.mxu0 0.0
    %444 = vmatpush1.xpose.msra.mxu0 0.0
    %445 = vmatprep.subr.mxu0 0.0
    %446 = vmatpush1.xpose.msra.mxu0 0.0
    %447 = vmatprep.subr.mxu0 0.0
    %448 = vmatpush1.xpose.msra.mxu0 0.0
    %449 = vmatprep.subr.mxu0 0.0
    %450 = vmatpush1.xpose.msra.mxu0 0.0
    %451 = vmatprep.subr.mxu0 0.0
    %452 = vmatpush1.xpose.msra.mxu0 0.0
    %453 = vmatprep.subr.mxu0 0.0
    %454 = vmatpush1.xpose.msra.mxu0 0.0
    %455 = vmatprep.subr.mxu0 0.0
    %456 = vmatpush1.xpose.msra.mxu0 0.0
    %457 = vmatprep.subr.mxu0 0.0
    %458 = vmatpush1.xpose.msra.mxu0 0.0
    %459 = vmatprep.subr.mxu0 0.0
    %460 = vmatpush1.xpose.msra.mxu0 0.0
    %461 = vmatprep.subr.mxu0 0.0
    %462 = vmatpush1.xpose.msra.mxu0 0.0
    %463 = vmatprep.mubr.f32.mxu0 %v83
    %464 = vmatmul.mubr.f32.gmra.mrb[0].mxu0 %v59
    %v465 = vpop.f32.mrb[0].mxu0
    %v466 = vadd.f32 %v396, %v465
    %v467 = vpop.f32.mrb[0].mxu0
    %468 = vdwg.mxu0
    %469 = vmatprep.subr.mxu0 %v108
    %470 = vmatpush1.xpose.msra.mxu0 %v68
    %471 = vmatprep.subr.mxu0 0.0
    %472 = vmatpush1.xpose.msra.mxu0 0.0
    %473 = vmatprep.subr.mxu0 0.0
    %474 = vmatpush1.xpose.msra.mxu0 0.0
    %475 = vmatprep.subr.mxu0 0.0
    %476 = vmatpush1.xpose.msra.mxu0 0.0
    %477 = vmatprep.subr.mxu0 0.0
    %478 = vmatpush1.xpose.msra.mxu0 0.0
    %479 = vmatprep.subr.mxu0 0.0
    %480 = vmatpush1.xpose.msra.mxu0 0.0
    %481 = vmatprep.subr.mxu0 0.0
    %482 = vmatpush1.xpose.msra.mxu0 0.0
    %483 = vmatprep.subr.mxu0 0.0
    %484 = vmatpush1.xpose.msra.mxu0 0.0
    %485 = vmatprep.subr.mxu0 0.0
    %486 = vmatpush1.xpose.msra.mxu0 0.0
    %487 = vmatprep.subr.mxu0 0.0
    %488 = vmatpush1.xpose.msra.mxu0 0.0
    %489 = vmatprep.subr.mxu0 0.0
    %490 = vmatpush1.xpose.msra.mxu0 0.0
    %491 = vmatprep.subr.mxu0 0.0
    %492 = vmatpush1.xpose.msra.mxu0 0.0
    %493 = vmatprep.subr.mxu0 0.0
    %494 = vmatpush1.xpose.msra.mxu0 0.0
    %495 = vmatprep.subr.mxu0 0.0
    %496 = vmatpush1.xpose.msra.mxu0 0.0
    %497 = vmatprep.subr.mxu0 0.0
    %498 = vmatpush1.xpose.msra.mxu0 0.0
    %499 = vmatprep.subr.mxu0 0.0
    %500 = vmatpush1.xpose.msra.mxu0 0.0
    %501 = vmatprep.subr.mxu0 0.0
    %502 = vmatpush1.xpose.msra.mxu0 0.0
    %503 = vmatprep.subr.mxu0 0.0
    %504 = vmatpush1.xpose.msra.mxu0 0.0
    %505 = vmatprep.subr.mxu0 0.0
    %506 = vmatpush1.xpose.msra.mxu0 0.0
    %507 = vmatprep.subr.mxu0 0.0
    %508 = vmatpush1.xpose.msra.mxu0 0.0
    %509 = vmatprep.subr.mxu0 0.0
    %510 = vmatpush1.xpose.msra.mxu0 0.0
    %511 = vmatprep.subr.mxu0 0.0
    %512 = vmatpush1.xpose.msra.mxu0 0.0
    %513 = vmatprep.subr.mxu0 0.0
    %514 = vmatpush1.xpose.msra.mxu0 0.0
    %515 = vmatprep.subr.mxu0 0.0
    %516 = vmatpush1.xpose.msra.mxu0 0.0
    %517 = vmatprep.subr.mxu0 0.0
    %518 = vmatpush1.xpose.msra.mxu0 0.0
    %519 = vmatprep.subr.mxu0 0.0
    %520 = vmatpush1.xpose.msra.mxu0 0.0
    %521 = vmatprep.subr.mxu0 0.0
    %522 = vmatpush1.xpose.msra.mxu0 0.0
    %523 = vmatprep.subr.mxu0 0.0
    %524 = vmatpush1.xpose.msra.mxu0 0.0
    %525 = vmatprep.subr.mxu0 0.0
    %526 = vmatpush1.xpose.msra.mxu0 0.0
    %527 = vmatprep.subr.mxu0 0.0
    %528 = vmatpush1.xpose.msra.mxu0 0.0
    %529 = vmatprep.subr.mxu0 0.0
    %530 = vmatpush1.xpose.msra.mxu0 0.0
    %531 = vmatprep.subr.mxu0 0.0
    %532 = vmatpush1.xpose.msra.mxu0 0.0
    %533 = vmatprep.mubr.f32.mxu0 %v84
    %534 = vmatmul.mubr.f32.gmra.mrb[0].mxu0 %v60
    %v535 = vpop.f32.mrb[0].mxu0
    %v536 = vadd.f32 %v466, %v535
    %v537 = vpop.f32.mrb[0].mxu0
    %538 = vdwg.mxu0
    %539 = vmatprep.subr.mxu0 %v109
    %540 = vmatpush1.xpose.msra.mxu0 %v69
    %541 = vmatprep.subr.mxu0 0.0
    %542 = vmatpush1.xpose.msra.mxu0 0.0
    %543 = vmatprep.subr.mxu0 0.0
    %544 = vmatpush1.xpose.msra.mxu0 0.0
    %545 = vmatprep.subr.mxu0 0.0
    %546 = vmatpush1.xpose.msra.mxu0 0.0
    %547 = vmatprep.subr.mxu0 0.0
    %548 = vmatpush1.xpose.msra.mxu0 0.0
    %549 = vmatprep.subr.mxu0 0.0
    %550 = vmatpush1.xpose.msra.mxu0 0.0
    %551 = vmatprep.subr.mxu0 0.0
    %552 = vmatpush1.xpose.msra.mxu0 0.0
    %553 = vmatprep.subr.mxu0 0.0
    %554 = vmatpush1.xpose.msra.mxu0 0.0
    %555 = vmatprep.subr.mxu0 0.0
    %556 = vmatpush1.xpose.msra.mxu0 0.0
    %557 = vmatprep.subr.mxu0 0.0
    %558 = vmatpush1.xpose.msra.mxu0 0.0
    %559 = vmatprep.subr.mxu0 0.0
    %560 = vmatpush1.xpose.msra.mxu0 0.0
    %561 = vmatprep.subr.mxu0 0.0
    %562 = vmatpush1.xpose.msra.mxu0 0.0
    %563 = vmatprep.subr.mxu0 0.0
    %564 = vmatpush1.xpose.msra.mxu0 0.0
    %565 = vmatprep.subr.mxu0 0.0
    %566 = vmatpush1.xpose.msra.mxu0 0.0
    %567 = vmatprep.subr.mxu0 0.0
    %568 = vmatpush1.xpose.msra.mxu0 0.0
    %569 = vmatprep.subr.mxu0 0.0
    %570 = vmatpush1.xpose.msra.mxu0 0.0
    %571 = vmatprep.subr.mxu0 0.0
    %572 = vmatpush1.xpose.msra.mxu0 0.0
    %573 = vmatprep.subr.mxu0 0.0
    %574 = vmatpush1.xpose.msra.mxu0 0.0
    %575 = vmatprep.subr.mxu0 0.0
    %576 = vmatpush1.xpose.msra.mxu0 0.0
    %577 = vmatprep.subr.mxu0 0.0
    %578 = vmatpush1.xpose.msra.mxu0 0.0
    %579 = vmatprep.subr.mxu0 0.0
    %580 = vmatpush1.xpose.msra.mxu0 0.0
    %581 = vmatprep.subr.mxu0 0.0
    %582 = vmatpush1.xpose.msra.mxu0 0.0
    %583 = vmatprep.subr.mxu0 0.0
    %584 = vmatpush1.xpose.msra.mxu0 0.0
    %585 = vmatprep.subr.mxu0 0.0
    %586 = vmatpush1.xpose.msra.mxu0 0.0
    %587 = vmatprep.subr.mxu0 0.0
    %588 = vmatpush1.xpose.msra.mxu0 0.0
    %589 = vmatprep.subr.mxu0 0.0
    %590 = vmatpush1.xpose.msra.mxu0 0.0
    %591 = vmatprep.subr.mxu0 0.0
    %592 = vmatpush1.xpose.msra.mxu0 0.0
    %593 = vmatprep.subr.mxu0 0.0
    %594 = vmatpush1.xpose.msra.mxu0 0.0
    %595 = vmatprep.subr.mxu0 0.0
    %596 = vmatpush1.xpose.msra.mxu0 0.0
    %597 = vmatprep.subr.mxu0 0.0
    %598 = vmatpush1.xpose.msra.mxu0 0.0
    %599 = vmatprep.subr.mxu0 0.0
    %600 = vmatpush1.xpose.msra.mxu0 0.0
    %601 = vmatprep.subr.mxu0 0.0
    %602 = vmatpush1.xpose.msra.mxu0 0.0
    %603 = vmatprep.mubr.f32.mxu0 %v85
    %604 = vmatmul.mubr.f32.gmra.mrb[0].mxu0 %v61
    %v605 = vpop.f32.mrb[0].mxu0
    %v606 = vadd.f32 %v536, %v605
    %v607 = vpop.f32.mrb[0].mxu0
    %608 = vdwg.mxu0
    %609 = vmatprep.subr.mxu0 %v110
    %610 = vmatpush1.xpose.msra.mxu0 %v70
    %611 = vmatprep.subr.mxu0 0.0
    %612 = vmatpush1.xpose.msra.mxu0 0.0
    %613 = vmatprep.subr.mxu0 0.0
    %614 = vmatpush1.xpose.msra.mxu0 0.0
    %615 = vmatprep.subr.mxu0 0.0
    %616 = vmatpush1.xpose.msra.mxu0 0.0
    %617 = vmatprep.subr.mxu0 0.0
    %618 = vmatpush1.xpose.msra.mxu0 0.0
    %619 = vmatprep.subr.mxu0 0.0
    %620 = vmatpush1.xpose.msra.mxu0 0.0
    %621 = vmatprep.subr.mxu0 0.0
    %622 = vmatpush1.xpose.msra.mxu0 0.0
    %623 = vmatprep.subr.mxu0 0.0
    %624 = vmatpush1.xpose.msra.mxu0 0.0
    %625 = vmatprep.subr.mxu0 0.0
    %626 = vmatpush1.xpose.msra.mxu0 0.0
    %627 = vmatprep.subr.mxu0 0.0
    %628 = vmatpush1.xpose.msra.mxu0 0.0
    %629 = vmatprep.subr.mxu0 0.0
    %630 = vmatpush1.xpose.msra.mxu0 0.0
    %631 = vmatprep.subr.mxu0 0.0
    %632 = vmatpush1.xpose.msra.mxu0 0.0
    %633 = vmatprep.subr.mxu0 0.0
    %634 = vmatpush1.xpose.msra.mxu0 0.0
    %635 = vmatprep.subr.mxu0 0.0
    %636 = vmatpush1.xpose.msra.mxu0 0.0
    %637 = vmatprep.subr.mxu0 0.0
    %638 = vmatpush1.xpose.msra.mxu0 0.0
    %639 = vmatprep.subr.mxu0 0.0
    %640 = vmatpush1.xpose.msra.mxu0 0.0
    %641 = vmatprep.subr.mxu0 0.0
    %642 = vmatpush1.xpose.msra.mxu0 0.0
    %643 = vmatprep.subr.mxu0 0.0
    %644 = vmatpush1.xpose.msra.mxu0 0.0
    %645 = vmatprep.subr.mxu0 0.0
    %646 = vmatpush1.xpose.msra.mxu0 0.0
    %647 = vmatprep.subr.mxu0 0.0
    %648 = vmatpush1.xpose.msra.mxu0 0.0
    %649 = vmatprep.subr.mxu0 0.0
    %650 = vmatpush1.xpose.msra.mxu0 0.0
    %651 = vmatprep.subr.mxu0 0.0
    %652 = vmatpush1.xpose.msra.mxu0 0.0
    %653 = vmatprep.subr.mxu0 0.0
    %654 = vmatpush1.xpose.msra.mxu0 0.0
    %655 = vmatprep.subr.mxu0 0.0
    %656 = vmatpush1.xpose.msra.mxu0 0.0
    %657 = vmatprep.subr.mxu0 0.0
    %658 = vmatpush1.xpose.msra.mxu0 0.0
    %659 = vmatprep.subr.mxu0 0.0
    %660 = vmatpush1.xpose.msra.mxu0 0.0
    %661 = vmatprep.subr.mxu0 0.0
    %662 = vmatpush1.xpose.msra.mxu0 0.0
    %663 = vmatprep.subr.mxu0 0.0
    %664 = vmatpush1.xpose.msra.mxu0 0.0
    %665 = vmatprep.subr.mxu0 0.0
    %666 = vmatpush1.xpose.msra.mxu0 0.0
    %667 = vmatprep.subr.mxu0 0.0
    %668 = vmatpush1.xpose.msra.mxu0 0.0
    %669 = vmatprep.subr.mxu0 0.0
    %670 = vmatpush1.xpose.msra.mxu0 0.0
    %671 = vmatprep.subr.mxu0 0.0
    %672 = vmatpush1.xpose.msra.mxu0 0.0
    %673 = vmatprep.mubr.f32.mxu0 %v86
    %674 = vmatmul.mubr.f32.gmra.mrb[0].mxu0 %v62
    %v675 = vpop.f32.mrb[0].mxu0
    %v676 = vadd.f32 %v606, %v675
    %v677 = vpop.f32.mrb[0].mxu0
    %678 = vdwg.mxu0
    %v679 = vadd.f32 %v54, %v676
    %vm680 = vcmask 27648
    %681 = vst.msk [vmem:[#allocation2] sm:$0xf] %vm680, %v679
    // Predicated region
    $region22: #{tpu_custom_call.1} parent=1 // pred_check
      %p682 = pneg %p48
    $region23: #{tpu_custom_call.1} parent=1 // pred_check_branch
      %684 = sbr.rel (%p682) target = $region25
    $region24: #{tpu_custom_call.1} parent=1 // pred_region
      %v685 = vld [vmem:[#allocation2] sm:$0xf]
      %686 = vst.msk [vmem:[#allocation8] sm:$0xf] %vm680, %v685
    $region25: #{tpu_custom_call.1} parent=1 // pred_fallthru
      _
    // Predicated region
    $region26: #{tpu_custom_call.1} parent=1 // pred_check
      _
    $region27: #{tpu_custom_call.1} parent=1 // pred_check_branch
      %688 = sbr.rel (0) target = $region29
    $region28: #{tpu_custom_call.1} parent=1 // pred_region
      %s690 = ssub.s32 64, 64
      %691 = vsyncadd [#allocation5], %s690
      %s693 = sshll.u32 [#allocation8], 4
      %s694 = int_to_ptr.vmem [resolvable:$true] %s693
      %696 = dma.vmem_to_hbm [thread:$0]  %s694, 64, %s2, [#allocation5]
    $region29: #{tpu_custom_call.1} parent=1 // pred_fallthru
      _
    // Predicated region
    $region30: #{tpu_custom_call.1} parent=1 // pred_check
      _
    $region31: #{tpu_custom_call.1} parent=1 // pred_check_branch
      %698 = sbr.rel (0) target = $region33
    $region32: #{tpu_custom_call.1} parent=1 // pred_region
      %699 = dma.done [#allocation5], 64
    $region33: #{tpu_custom_call.1} parent=1 // pred_fallthru
      _
    %700 = vsyncpa [#allocation4], 1
    %701 = vsyncpa [#allocation7], 1
    %702 = vsyncpa [#allocation5], 1

</llo_original>
